<compile_context>
chip_gen: v7x
topology: tpu7x:2x2x1
jax: 0.10.0
libtpu: 0.0.40
codegen_flags: <defaults>
</compile_context>

<pallas_src>
import jax
import jax.numpy as jnp
from jax.experimental import pallas as pl
from jax.experimental.pallas import tpu as pltpu

GN_EPS = 1e-6
NUM_GROUPS = 32  # GroupNorm(32, C) as in the standard AttnBlock / Normalize()


# --------------------------------------------------------------------------
# Kernel body: one grid step handles `bb` batch samples in (bb, C, N) layout.
# --------------------------------------------------------------------------
def _attn_body(x_ref, gamma_ref, beta_ref, wqkv_ref, bqkv_ref, wp_ref, bp_ref,
               o_ref, gm_ref=None, gmT_ref=None):
    x = x_ref[...].astype(jnp.float32)                    # (bb, C, N) residual in f32
    bb, c, n = x.shape

    # ---- GroupNorm(32, C, eps=1e-6) statistics -------------------------------
    row_sum = jnp.sum(x, axis=2, keepdims=True)           # (bb, C, 1) lane reduce
    row_sq = jnp.sum(x * x, axis=2, keepdims=True)        # (bb, C, 1)
    if gm_ref is None:
        # channels-per-group == 1: per-group stats == per-channel stats.
        inv = 1.0 / float(n)
        mean_c = row_sum * inv
        var_c = row_sq * inv - mean_c * mean_c
    else:
        g = gm_ref.shape[1]
        cg = c // g
        inv = 1.0 / float(n * cg)
        gm = gm_ref[...]                                   # (C, G) 0/1 membership
        gmT = gmT_ref[...]                                 # (G, C)
        g_mean = jnp.dot(row_sum[..., 0], gm, preferred_element_type=jnp.float32) * inv
        g_sq = jnp.dot(row_sq[..., 0], gm, preferred_element_type=jnp.float32) * inv
        g_var = g_sq - g_mean * g_mean
        mean_c = jnp.dot(g_mean, gmT, preferred_element_type=jnp.float32)[..., None]
        var_c = jnp.dot(g_var, gmT, preferred_element_type=jnp.float32)[..., None]
    var_c = jnp.maximum(var_c, 0.0)                        # guard E[x^2]-E[x]^2 cancellation
    rstd = jax.lax.rsqrt(var_c + GN_EPS)                   # (bb, C, 1)

    # Fold normalize + affine into one scale/shift (2 VPU passes over (bb,C,N)).
    a_c = gamma_ref[...] * rstd                            # (C,1)*(bb,C,1) -> (bb,C,1)
    b_c = beta_ref[...] - mean_c * a_c
    hn_bf = (x * a_c + b_c).astype(jnp.bfloat16)           # (bb, C, N)

    # ---- per-sample attention (bb is a small, trace-time constant) -----------
    scale = float(c) ** -0.5
    wqkvT = wqkv_ref[...]                                  # (3C, C) bf16
    bqkvT = bqkv_ref[...]                                  # (3C, 1) f32
    wpT = wp_ref[...]                                      # (C, C)  bf16
    bpT = bp_ref[...]                                      # (C, 1)  f32

    for i in range(bb):
        h_i = hn_bf[i]                                     # (C, N)
        # fused q/k/v projection: weight-stationary, contracts over C (MXU native)
        qkv = jnp.dot(wqkvT, h_i, preferred_element_type=jnp.float32) + bqkvT  # (3C, N) f32
        # split along sublane dim at multiples of C (8-aligned); scale folded into q
        q = (qkv[0 * c:1 * c] * scale).astype(jnp.bfloat16)   # (C, N)
        k = qkv[1 * c:2 * c].astype(jnp.bfloat16)             # (C, N)
        v = qkv[2 * c:3 * c].astype(jnp.bfloat16)             # (C, N)

        # scores: explicit small transpose of q keeps the MXU dot native-oriented
        qT = q.T                                            # (N, C) -- XLU, O(N*C)
        s = jnp.dot(qT, k, preferred_element_type=jnp.float32)   # (N, N) f32
        s = s - jnp.max(s, axis=-1, keepdims=True)
        e = jnp.exp(s)                                      # f32 exp (v5e-safe)
        p = (e * pl.reciprocal(jnp.sum(e, axis=-1, keepdims=True),
                               approx=True)).astype(jnp.bfloat16)  # (N, N)

        # av[c,i] = sum_j v[c,j] p[i,j]  (rhs-transposed dot, natively supported)
        av = jax.lax.dot_general(v, p, (((1,), (1,)), ((), ())),
                                 preferred_element_type=jnp.float32)  # (C, N)
        av = av.astype(jnp.bfloat16)

        # proj_out (1x1 conv) + residual
        out_i = jnp.dot(wpT, av, preferred_element_type=jnp.float32) + bpT    # (C, N)
        o_ref[i] = (x[i] + out_i).astype(o_ref.dtype)


def _kernel_no_groups(x_ref, gamma_ref, beta_ref, wqkv_ref, bqkv_ref,
                      wp_ref, bp_ref, o_ref):
    _attn_body(x_ref, gamma_ref, beta_ref, wqkv_ref, bqkv_ref, wp_ref, bp_ref,
               o_ref)


def _kernel_with_groups(x_ref, gamma_ref, beta_ref, gm_ref, gmT_ref,
                        wqkv_ref, bqkv_ref, wp_ref, bp_ref, o_ref):
    _attn_body(x_ref, gamma_ref, beta_ref, wqkv_ref, bqkv_ref, wp_ref, bp_ref,
               o_ref, gm_ref, gmT_ref)


# --------------------------------------------------------------------------
# Host-side wrapper
# --------------------------------------------------------------------------
def _tpu_kind():
    try:
        return jax.devices()[0].device_kind.lower()
    except Exception:
        return ""


def _vmem_cap_bytes(kind):
    # v7x: 64 MiB physical -> leave headroom; v5e/v6e: 128 MiB physical.
    if "v7" in kind:
        return 48 << 20
    return 96 << 20


def _is_megacore(kind):
    # 2 TensorCores per chip share the grid via "parallel" dimension semantics.
    return ("v7" in kind) or ("v4" in kind)


def prepare_params(params):
    """One-time packing of AttnBlock params into kernel-facing layout.

    Hoisted out of the forward path: fused/transposed qkv weight in bf16,
    transposed proj weight in bf16, column-vector biases/affine in f32,
    group-membership matrices only when channels-per-group > 1.
    """
    c = params['wq'].shape[0]
    packed = dict(
        gammaT=params['gamma'].reshape(c, 1).astype(jnp.float32),
        betaT=params['beta'].reshape(c, 1).astype(jnp.float32),
        wqkvT=jnp.concatenate([params['wq'], params['wk'], params['wv']],
                              axis=1).T.astype(jnp.bfloat16),            # (3C, C)
        bqkvT=jnp.concatenate([params['bq'], params['bk'], params['bv']],
                              axis=1).reshape(3 * c, 1).astype(jnp.float32),
        wpT=params['wp'].T.astype(jnp.bfloat16),                          # (C, C)
        bpT=params['bp'].reshape(c, 1).astype(jnp.float32),
    )
    g = NUM_GROUPS
    assert c % g == 0, f"C={c} must be divisible by {g} groups"
    if c // g > 1:
        cg = c // g
        ch = jnp.arange(c)
        gm = (ch[:, None] // cg == jnp.arange(g)[None, :]).astype(jnp.float32)
        packed['gm'] = gm                                                 # (C, G)
        packed['gmT'] = gm.T                                              # (G, C)
    return packed


def _const2d(shape):
    return pl.BlockSpec(shape, lambda i: (0, 0))


def attn_block_pallas(x_bcn, packed, *, batch_block=None, interpret=False):
    """AttnBlock forward on x in (B, C, N) layout -> (B, C, N)."""
    b, c, n = x_bcn.shape
    has_groups = 'gm' in packed
    kind = _tpu_kind()
    cap = _vmem_cap_bytes(kind)

    # Rough per-sample VMEM footprint (bytes): x in/out (double-buffered), qkv,
    # q/k/v bf16, scores/exp/probs, av/proj intermediates.
    per_sample = (4 * (n * c * 4)
                  + 2 * (3 * c * n * 4)
                  + 3 * (n * n * 4)
                  + 3 * (c * n * 4))
    weight_bytes = 2 * ((3 * c * c + c * c) * 2 + 8 * c * 4)
    if has_groups:
        weight_bytes += 2 * (2 * c * NUM_GROUPS * 4)
    budget = max(cap - weight_bytes - (8 << 20), 4 << 20)

    if batch_block is None:
        divisors = [d for d in range(1, b + 1) if b % d == 0]
        fitting = [d for d in divisors if d * per_sample <= budget] or [1]
        batch_block = max(fitting)
        if _is_megacore(kind) and b >= 2:
            # Make the "parallel" batch axis actually shard across both TCs.
            halved = [d for d in fitting if d <= b // 2] or [1]
            batch_block = max(halved)
    assert b % batch_block == 0
    grid = (b // batch_block,)

    need = batch_block * per_sample + weight_bytes
    vmem_limit = int(min(max(need + (8 << 20), 32 << 20), cap))

    x_spec = pl.BlockSpec((batch_block, c, n), lambda i: (i, 0, 0))
    in_specs = [x_spec, _const2d((c, 1)), _const2d((c, 1))]
    args = [x_bcn, packed['gammaT'], packed['betaT']]
    if has_groups:
        in_specs += [_const2d((c, NUM_GROUPS)), _const2d((NUM_GROUPS, c))]
        args += [packed['gm'], packed['gmT']]
        kernel = _kernel_with_groups
    else:
        kernel = _kernel_no_groups
    in_specs += [_const2d((3 * c, c)), _const2d((3 * c, 1)),
                 _const2d((c, c)), _const2d((c, 1))]
    args += [packed['wqkvT'], packed['bqkvT'], packed['wpT'], packed['bpT']]

    grid_spec = pltpu.PrefetchScalarGridSpec(
        num_scalar_prefetch=0,
        grid=grid,
        in_specs=in_specs,
        out_specs=pl.BlockSpec((batch_block, c, n), lambda i: (i, 0, 0)),
    )

    return pl.pallas_call(
        kernel,
        out_shape=jax.ShapeDtypeStruct((b, c, n), x_bcn.dtype),
        grid_spec=grid_spec,
        compiler_params=pltpu.CompilerParams(
            dimension_semantics=("parallel",),
            vmem_limit_bytes=vmem_limit),
        interpret=interpret,
    )(*args)


def multifuser_forward(x_nchw, packed_params):
    """MultiFuser.forward: h = attn1(x).squeeze(-1). No layout round trips."""
    b, c, h, w = x_nchw.shape
    n = h * w
    x_bcn = x_nchw.reshape(b, c, n)            # free view: C on sublanes, N on lanes
    out_bcn = attn_block_pallas(x_bcn, packed_params)
    out = out_bcn.reshape(b, c, h, w)
    if w == 1:                                 # torch .squeeze(-1)
        out = jnp.squeeze(out, axis=-1)
    return out


# --------------------------------------------------------------------------
# Parameter init + pure-JAX f32 reference (for the correctness check)
# --------------------------------------------------------------------------
def init_params(key, c):
    assert c % NUM_GROUPS == 0, f"C={c} must be divisible by {NUM_GROUPS} groups"
    ks = jax.random.split(key, 8)
    s = 1.0 / jnp.sqrt(jnp.float32(c))
    mk_w = lambda k: (jax.random.normal(k, (c, c), jnp.float32) * s)   # (C_in, C_out)
    mk_b = lambda k: (jax.random.normal(k, (1, c), jnp.float32) * 0.02)
    return dict(
        gamma=jnp.ones((1, c), jnp.float32),   # GroupNorm default affine init
        beta=jnp.zeros((1, c), jnp.float32),
        wq=mk_w(ks[0]), bq=mk_b(ks[1]),
        wk=mk_w(ks[2]), bk=mk_b(ks[3]),
        wv=mk_w(ks[4]), bv=mk_b(ks[5]),
        wp=mk_w(ks[6]), bp=mk_b(ks[7]),
    )


def multifuser_reference(x_nchw, params):
    b, c, h, w = x_nchw.shape
    g = NUM_GROUPS
    cg = c // g
    xg = x_nchw.reshape(b, g, cg, h, w).astype(jnp.float32)
    mean = jnp.mean(xg, axis=(2, 3, 4), keepdims=True)
    var = jnp.mean((xg - mean) ** 2, axis=(2, 3, 4), keepdims=True)
    hn = ((xg - mean) / jnp.sqrt(var + GN_EPS)).reshape(b, c, h, w)
    hn = hn * params['gamma'].reshape(1, c, 1, 1) + params['beta'].reshape(1, c, 1, 1)
    n = h * w
    hn = hn.reshape(b, c, n).transpose(0, 2, 1)                  # (B, N, C)
    q = hn @ params['wq'] + params['bq']
    k = hn @ params['wk'] + params['bk']
    v = hn @ params['wv'] + params['bv']
    scores = jnp.einsum('bic,bjc->bij', q, k) * (float(c) ** -0.5)
    attn = jax.nn.softmax(scores, axis=-1)
    out = jnp.einsum('bij,bjc->bic', attn, v)
    out = out @ params['wp'] + params['bp']
    x_seq = x_nchw.reshape(b, c, n).transpose(0, 2, 1)
    res = (x_seq + out).transpose(0, 2, 1).reshape(b, c, h, w)
    return jnp.squeeze(res, axis=-1) if w == 1 else res


if __name__ == "__main__":
    # MultiFuser(embed=16, number_of_features=2) -> attn channels C = 32
    embed, number_of_features = 16, 2
    C = embed * number_of_features
    B, H, W = 2, 8, 1                       # NCHW input (W=1 -> .squeeze(-1))

    key = jax.random.PRNGKey(0)
    kx, kp = jax.random.split(key)
    x = jax.random.normal(kx, (B, C, H, W), jnp.float32)
    params = init_params(kp, C)
    packed = prepare_params(params)         # one-time packing, cached beside params

    out = jax.block_until_ready(multifuser_forward(x, packed))
    ref = jax.block_until_ready(multifuser_reference(x, params))

    assert out.shape == (B, C, H), out.shape
    # Kernel uses bf16 MXU inputs (f32 accumulation) + approx-reciprocal softmax,
    # reference is pure f32 -> relaxed tolerance.
    max_err = float(jnp.max(jnp.abs(out - ref)))
    assert jnp.allclose(out, ref, atol=5e-2, rtol=5e-2), max_err
    print("KERNEL_OK")
</pallas_src>

<mosaic_0001>
module attributes {stable_mosaic.version = 11 : i64} {
  func.func @_kernel_no_groups(%arg0: i32, %arg1: memref<2x32x8xf32, #tpu.memory_space<vmem>>, %arg2: memref<32x1xf32, #tpu.memory_space<vmem>>, %arg3: memref<32x1xf32, #tpu.memory_space<vmem>>, %arg4: memref<96x32xbf16, #tpu.memory_space<vmem>>, %arg5: memref<96x1xf32, #tpu.memory_space<vmem>>, %arg6: memref<32x32xbf16, #tpu.memory_space<vmem>>, %arg7: memref<32x1xf32, #tpu.memory_space<vmem>>, %arg8: memref<2x32x8xf32, #tpu.memory_space<vmem>>) attributes {dimension_semantics = [#tpu.dimension_semantics<parallel>], iteration_bounds = array<i64: 1>, scalar_prefetch = 0 : i64, scratch_operands = 0 : i64, tpu.core_type = #tpu.core_type<tc>, window_params = [{transform_indices = @transform_0, window_bounds = array<i64: 2, 32, 8>}, {pipeline_mode = #tpu.pipeline_mode<synchronous>, transform_indices = @transform_1, window_bounds = array<i64: 32, 1>}, {pipeline_mode = #tpu.pipeline_mode<synchronous>, transform_indices = @transform_2, window_bounds = array<i64: 32, 1>}, {pipeline_mode = #tpu.pipeline_mode<synchronous>, transform_indices = @transform_3, window_bounds = array<i64: 96, 32>}, {pipeline_mode = #tpu.pipeline_mode<synchronous>, transform_indices = @transform_4, window_bounds = array<i64: 96, 1>}, {pipeline_mode = #tpu.pipeline_mode<synchronous>, transform_indices = @transform_5, window_bounds = array<i64: 32, 32>}, {pipeline_mode = #tpu.pipeline_mode<synchronous>, transform_indices = @transform_6, window_bounds = array<i64: 32, 1>}, {transform_indices = @transform_7, window_bounds = array<i64: 2, 32, 8>}]} {
    %c0 = arith.constant 0 : index
    %c0_0 = arith.constant 0 : index
    %c0_1 = arith.constant 0 : index
    %0 = vector.load %arg1[%c0, %c0_0, %c0_1] : memref<2x32x8xf32, #tpu.memory_space<vmem>>, vector<2x32x8xf32>
    %cst = arith.constant dense<0.000000e+00> : vector<2x32xf32>
    %1 = vector.multi_reduction <add>, %0, %cst [2] : vector<2x32x8xf32> to vector<2x32xf32>
    %2 = vector.shape_cast %1 : vector<2x32xf32> to vector<2x32x1xf32>
    %3 = arith.mulf %0, %0 : vector<2x32x8xf32>
    %cst_2 = arith.constant dense<0.000000e+00> : vector<2x32xf32>
    %4 = vector.multi_reduction <add>, %3, %cst_2 [2] : vector<2x32x8xf32> to vector<2x32xf32>
    %5 = vector.shape_cast %4 : vector<2x32xf32> to vector<2x32x1xf32>
    %cst_3 = arith.constant 1.250000e-01 : f32
    %6 = vector.broadcast %cst_3 : f32 to vector<2x32x1xf32>
    %7 = arith.mulf %2, %6 : vector<2x32x1xf32>
    %cst_4 = arith.constant 1.250000e-01 : f32
    %8 = vector.broadcast %cst_4 : f32 to vector<2x32x1xf32>
    %9 = arith.mulf %5, %8 : vector<2x32x1xf32>
    %10 = arith.mulf %7, %7 : vector<2x32x1xf32>
    %11 = arith.subf %9, %10 : vector<2x32x1xf32>
    %cst_5 = arith.constant 0.000000e+00 : f32
    %12 = vector.broadcast %cst_5 : f32 to vector<2x32x1xf32>
    %13 = arith.maximumf %11, %12 : vector<2x32x1xf32>
    %cst_6 = arith.constant 9.99999997E-7 : f32
    %14 = vector.broadcast %cst_6 : f32 to vector<2x32x1xf32>
    %15 = arith.addf %13, %14 : vector<2x32x1xf32>
    %16 = math.rsqrt %15 : vector<2x32x1xf32>
    %c0_7 = arith.constant 0 : index
    %c0_8 = arith.constant 0 : index
    %17 = vector.load %arg2[%c0_7, %c0_8] : memref<32x1xf32, #tpu.memory_space<vmem>>, vector<32x1xf32>
    %18 = vector.shape_cast %17 : vector<32x1xf32> to vector<1x32x1xf32>
    %19 = vector.broadcast %18 : vector<1x32x1xf32> to vector<2x32x1xf32>
    %20 = arith.mulf %19, %16 : vector<2x32x1xf32>
    %c0_9 = arith.constant 0 : index
    %c0_10 = arith.constant 0 : index
    %21 = vector.load %arg3[%c0_9, %c0_10] : memref<32x1xf32, #tpu.memory_space<vmem>>, vector<32x1xf32>
    %22 = arith.mulf %7, %20 : vector<2x32x1xf32>
    %23 = vector.shape_cast %21 : vector<32x1xf32> to vector<1x32x1xf32>
    %24 = vector.broadcast %23 : vector<1x32x1xf32> to vector<2x32x1xf32>
    %25 = arith.subf %24, %22 : vector<2x32x1xf32>
    %26 = vector.broadcast %20 : vector<2x32x1xf32> to vector<2x32x8xf32>
    %27 = arith.mulf %0, %26 : vector<2x32x8xf32>
    %28 = vector.broadcast %25 : vector<2x32x1xf32> to vector<2x32x8xf32>
    %29 = arith.addf %27, %28 : vector<2x32x8xf32>
    %30 = arith.truncf %29 : vector<2x32x8xf32> to vector<2x32x8xbf16>
    %c0_11 = arith.constant 0 : index
    %c0_12 = arith.constant 0 : index
    %31 = vector.load %arg4[%c0_11, %c0_12] : memref<96x32xbf16, #tpu.memory_space<vmem>>, vector<96x32xbf16>
    %c0_13 = arith.constant 0 : index
    %c0_14 = arith.constant 0 : index
    %32 = vector.load %arg5[%c0_13, %c0_14] : memref<96x1xf32, #tpu.memory_space<vmem>>, vector<96x1xf32>
    %c0_15 = arith.constant 0 : index
    %c0_16 = arith.constant 0 : index
    %33 = vector.load %arg6[%c0_15, %c0_16] : memref<32x32xbf16, #tpu.memory_space<vmem>>, vector<32x32xbf16>
    %c0_17 = arith.constant 0 : index
    %c0_18 = arith.constant 0 : index
    %34 = vector.load %arg7[%c0_17, %c0_18] : memref<32x1xf32, #tpu.memory_space<vmem>>, vector<32x1xf32>
    %35 = vector.extract_strided_slice %30 {offsets = [0, 0, 0], sizes = [1, 32, 8], strides = [1, 1, 1]} : vector<2x32x8xbf16> to vector<1x32x8xbf16>
    %36 = vector.shape_cast %35 : vector<1x32x8xbf16> to vector<32x8xbf16>
    %cst_19 = arith.constant dense<0.000000e+00> : vector<96x8xf32>
    %37 = tpu.matmul %31, %36, %cst_19 {dimension_numbers = #tpu.dot_dimension_numbers<[1], [0], [0], [1], [0, 0, 1, 1], [], []>} : vector<96x32xbf16>, vector<32x8xbf16>, vector<96x8xf32> -> vector<96x8xf32>
    %38 = vector.broadcast %32 : vector<96x1xf32> to vector<96x8xf32>
    %39 = arith.addf %37, %38 : vector<96x8xf32>
    %40 = vector.extract_strided_slice %39 {offsets = [0, 0], sizes = [32, 8], strides = [1, 1]} : vector<96x8xf32> to vector<32x8xf32>
    %cst_20 = arith.constant 0.176776692 : f32
    %41 = vector.broadcast %cst_20 : f32 to vector<32x8xf32>
    %42 = arith.mulf %40, %41 : vector<32x8xf32>
    %43 = arith.truncf %42 : vector<32x8xf32> to vector<32x8xbf16>
    %44 = vector.extract_strided_slice %39 {offsets = [32, 0], sizes = [32, 8], strides = [1, 1]} : vector<96x8xf32> to vector<32x8xf32>
    %45 = arith.truncf %44 : vector<32x8xf32> to vector<32x8xbf16>
    %46 = vector.extract_strided_slice %39 {offsets = [64, 0], sizes = [32, 8], strides = [1, 1]} : vector<96x8xf32> to vector<32x8xf32>
    %47 = arith.truncf %46 : vector<32x8xf32> to vector<32x8xbf16>
    %48 = tpu.transpose %43, [1, 0] : vector<32x8xbf16> -> vector<8x32xbf16>
    %cst_21 = arith.constant dense<0.000000e+00> : vector<8x8xf32>
    %49 = tpu.matmul %48, %45, %cst_21 {dimension_numbers = #tpu.dot_dimension_numbers<[1], [0], [0], [1], [0, 0, 1, 1], [], []>} : vector<8x32xbf16>, vector<32x8xbf16>, vector<8x8xf32> -> vector<8x8xf32>
    %cst_22 = arith.constant dense<0xFF800000> : vector<8xf32>
    %50 = vector.multi_reduction <maximumf>, %49, %cst_22 [1] : vector<8x8xf32> to vector<8xf32>
    %51 = vector.shape_cast %50 : vector<8xf32> to vector<8x1xf32>
    %52 = vector.broadcast %51 : vector<8x1xf32> to vector<8x8xf32>
    %53 = arith.subf %49, %52 : vector<8x8xf32>
    %54 = math.exp %53 : vector<8x8xf32>
    %cst_23 = arith.constant dense<0.000000e+00> : vector<8xf32>
    %55 = vector.multi_reduction <add>, %54, %cst_23 [1] : vector<8x8xf32> to vector<8xf32>
    %56 = vector.shape_cast %55 : vector<8xf32> to vector<8x1xf32>
    %57 = tpu.reciprocal %56 {approx = true} : vector<8x1xf32> -> vector<8x1xf32>
    %58 = vector.broadcast %57 : vector<8x1xf32> to vector<8x8xf32>
    %59 = arith.mulf %54, %58 : vector<8x8xf32>
    %60 = arith.truncf %59 : vector<8x8xf32> to vector<8x8xbf16>
    %cst_24 = arith.constant dense<0.000000e+00> : vector<32x8xf32>
    %61 = tpu.matmul %47, %60, %cst_24 {dimension_numbers = #tpu.dot_dimension_numbers<[1], [1], [0], [0], [0, 0, 1, 0], [], []>} : vector<32x8xbf16>, vector<8x8xbf16>, vector<32x8xf32> -> vector<32x8xf32>
    %62 = arith.truncf %61 : vector<32x8xf32> to vector<32x8xbf16>
    %cst_25 = arith.constant dense<0.000000e+00> : vector<32x8xf32>
    %63 = tpu.matmul %33, %62, %cst_25 {dimension_numbers = #tpu.dot_dimension_numbers<[1], [0], [0], [1], [0, 0, 1, 1], [], []>} : vector<32x32xbf16>, vector<32x8xbf16>, vector<32x8xf32> -> vector<32x8xf32>
    %64 = vector.broadcast %34 : vector<32x1xf32> to vector<32x8xf32>
    %65 = arith.addf %63, %64 : vector<32x8xf32>
    %66 = vector.extract_strided_slice %0 {offsets = [0, 0, 0], sizes = [1, 32, 8], strides = [1, 1, 1]} : vector<2x32x8xf32> to vector<1x32x8xf32>
    %67 = vector.shape_cast %66 : vector<1x32x8xf32> to vector<32x8xf32>
    %68 = arith.addf %67, %65 : vector<32x8xf32>
    %c0_26 = arith.constant 0 : index
    %c0_27 = arith.constant 0 : index
    %c0_28 = arith.constant 0 : index
    %69 = vector.load %arg8[%c0_26, %c0_27, %c0_28] : memref<2x32x8xf32, #tpu.memory_space<vmem>>, vector<1x32x8xf32>
    %70 = vector.shape_cast %69 : vector<1x32x8xf32> to vector<32x8xf32>
    %71 = vector.shape_cast %68 : vector<32x8xf32> to vector<1x32x8xf32>
    tpu.vector_store %arg8[%c0_26, %c0_27, %c0_28], %71 {strides = array<i32>} : memref<2x32x8xf32, #tpu.memory_space<vmem>>, vector<1x32x8xf32>,
    %72 = vector.extract_strided_slice %30 {offsets = [1, 0, 0], sizes = [1, 32, 8], strides = [1, 1, 1]} : vector<2x32x8xbf16> to vector<1x32x8xbf16>
    %73 = vector.shape_cast %72 : vector<1x32x8xbf16> to vector<32x8xbf16>
    %cst_29 = arith.constant dense<0.000000e+00> : vector<96x8xf32>
    %74 = tpu.matmul %31, %73, %cst_29 {dimension_numbers = #tpu.dot_dimension_numbers<[1], [0], [0], [1], [0, 0, 1, 1], [], []>} : vector<96x32xbf16>, vector<32x8xbf16>, vector<96x8xf32> -> vector<96x8xf32>
    %75 = vector.broadcast %32 : vector<96x1xf32> to vector<96x8xf32>
    %76 = arith.addf %74, %75 : vector<96x8xf32>
    %77 = vector.extract_strided_slice %76 {offsets = [0, 0], sizes = [32, 8], strides = [1, 1]} : vector<96x8xf32> to vector<32x8xf32>
    %cst_30 = arith.constant 0.176776692 : f32
    %78 = vector.broadcast %cst_30 : f32 to vector<32x8xf32>
    %79 = arith.mulf %77, %78 : vector<32x8xf32>
    %80 = arith.truncf %79 : vector<32x8xf32> to vector<32x8xbf16>
    %81 = vector.extract_strided_slice %76 {offsets = [32, 0], sizes = [32, 8], strides = [1, 1]} : vector<96x8xf32> to vector<32x8xf32>
    %82 = arith.truncf %81 : vector<32x8xf32> to vector<32x8xbf16>
    %83 = vector.extract_strided_slice %76 {offsets = [64, 0], sizes = [32, 8], strides = [1, 1]} : vector<96x8xf32> to vector<32x8xf32>
    %84 = arith.truncf %83 : vector<32x8xf32> to vector<32x8xbf16>
    %85 = tpu.transpose %80, [1, 0] : vector<32x8xbf16> -> vector<8x32xbf16>
    %cst_31 = arith.constant dense<0.000000e+00> : vector<8x8xf32>
    %86 = tpu.matmul %85, %82, %cst_31 {dimension_numbers = #tpu.dot_dimension_numbers<[1], [0], [0], [1], [0, 0, 1, 1], [], []>} : vector<8x32xbf16>, vector<32x8xbf16>, vector<8x8xf32> -> vector<8x8xf32>
    %cst_32 = arith.constant dense<0xFF800000> : vector<8xf32>
    %87 = vector.multi_reduction <maximumf>, %86, %cst_32 [1] : vector<8x8xf32> to vector<8xf32>
    %88 = vector.shape_cast %87 : vector<8xf32> to vector<8x1xf32>
    %89 = vector.broadcast %88 : vector<8x1xf32> to vector<8x8xf32>
    %90 = arith.subf %86, %89 : vector<8x8xf32>
    %91 = math.exp %90 : vector<8x8xf32>
    %cst_33 = arith.constant dense<0.000000e+00> : vector<8xf32>
    %92 = vector.multi_reduction <add>, %91, %cst_33 [1] : vector<8x8xf32> to vector<8xf32>
    %93 = vector.shape_cast %92 : vector<8xf32> to vector<8x1xf32>
    %94 = tpu.reciprocal %93 {approx = true} : vector<8x1xf32> -> vector<8x1xf32>
    %95 = vector.broadcast %94 : vector<8x1xf32> to vector<8x8xf32>
    %96 = arith.mulf %91, %95 : vector<8x8xf32>
    %97 = arith.truncf %96 : vector<8x8xf32> to vector<8x8xbf16>
    %cst_34 = arith.constant dense<0.000000e+00> : vector<32x8xf32>
    %98 = tpu.matmul %84, %97, %cst_34 {dimension_numbers = #tpu.dot_dimension_numbers<[1], [1], [0], [0], [0, 0, 1, 0], [], []>} : vector<32x8xbf16>, vector<8x8xbf16>, vector<32x8xf32> -> vector<32x8xf32>
    %99 = arith.truncf %98 : vector<32x8xf32> to vector<32x8xbf16>
    %cst_35 = arith.constant dense<0.000000e+00> : vector<32x8xf32>
    %100 = tpu.matmul %33, %99, %cst_35 {dimension_numbers = #tpu.dot_dimension_numbers<[1], [0], [0], [1], [0, 0, 1, 1], [], []>} : vector<32x32xbf16>, vector<32x8xbf16>, vector<32x8xf32> -> vector<32x8xf32>
    %101 = vector.broadcast %34 : vector<32x1xf32> to vector<32x8xf32>
    %102 = arith.addf %100, %101 : vector<32x8xf32>
    %103 = vector.extract_strided_slice %0 {offsets = [1, 0, 0], sizes = [1, 32, 8], strides = [1, 1, 1]} : vector<2x32x8xf32> to vector<1x32x8xf32>
    %104 = vector.shape_cast %103 : vector<1x32x8xf32> to vector<32x8xf32>
    %105 = arith.addf %104, %102 : vector<32x8xf32>
    %c1 = arith.constant 1 : index
    %c0_36 = arith.constant 0 : index
    %c0_37 = arith.constant 0 : index
    %106 = vector.load %arg8[%c1, %c0_36, %c0_37] : memref<2x32x8xf32, #tpu.memory_space<vmem>>, vector<1x32x8xf32>
    %107 = vector.shape_cast %106 : vector<1x32x8xf32> to vector<32x8xf32>
    %108 = vector.shape_cast %105 : vector<32x8xf32> to vector<1x32x8xf32>
    tpu.vector_store %arg8[%c1, %c0_36, %c0_37], %108 {strides = array<i32>} : memref<2x32x8xf32, #tpu.memory_space<vmem>>, vector<1x32x8xf32>,
    return
  }
  func.func @transform_0(%arg0: i32) -> (i32, i32, i32) {
    %c0_i32 = arith.constant 0 : i32
    %c0_i32_0 = arith.constant 0 : i32
    %c0_i32_1 = arith.constant 0 : i32
    return %arg0, %c0_i32, %c0_i32_0 : i32, i32, i32
  }
  func.func @transform_1(%arg0: i32) -> (i32, i32) {
    %c0_i32 = arith.constant 0 : i32
    %c0_i32_0 = arith.constant 0 : i32
    %c0_i32_1 = arith.constant 0 : i32
    return %c0_i32, %c0_i32_0 : i32, i32
  }
  func.func @transform_2(%arg0: i32) -> (i32, i32) {
    %c0_i32 = arith.constant 0 : i32
    %c0_i32_0 = arith.constant 0 : i32
    %c0_i32_1 = arith.constant 0 : i32
    return %c0_i32, %c0_i32_0 : i32, i32
  }
  func.func @transform_3(%arg0: i32) -> (i32, i32) {
    %c0_i32 = arith.constant 0 : i32
    %c0_i32_0 = arith.constant 0 : i32
    %c0_i32_1 = arith.constant 0 : i32
    return %c0_i32, %c0_i32_0 : i32, i32
  }
  func.func @transform_4(%arg0: i32) -> (i32, i32) {
    %c0_i32 = arith.constant 0 : i32
    %c0_i32_0 = arith.constant 0 : i32
    %c0_i32_1 = arith.constant 0 : i32
    return %c0_i32, %c0_i32_0 : i32, i32
  }
  func.func @transform_5(%arg0: i32) -> (i32, i32) {
    %c0_i32 = arith.constant 0 : i32
    %c0_i32_0 = arith.constant 0 : i32
    %c0_i32_1 = arith.constant 0 : i32
    return %c0_i32, %c0_i32_0 : i32, i32
  }
  func.func @transform_6(%arg0: i32) -> (i32, i32) {
    %c0_i32 = arith.constant 0 : i32
    %c0_i32_0 = arith.constant 0 : i32
    %c0_i32_1 = arith.constant 0 : i32
    return %c0_i32, %c0_i32_0 : i32, i32
  }
  func.func @transform_7(%arg0: i32) -> (i32, i32, i32) {
    %c0_i32 = arith.constant 0 : i32
    %c0_i32_0 = arith.constant 0 : i32
    %c0_i32_1 = arith.constant 0 : i32
    return %arg0, %c0_i32, %c0_i32_0 : i32, i32, i32
  }
}

</mosaic_0001>

<llo_original>
// kernel: tpu_custom_call.1
$region0: #{tpu_custom_call.1}
  #allocation0 [shape = 'u32[]', space=smem, size = 0x4, offset = 0x4, fixed_abs, tag = 'smem constant byte address 0x4 - core index']
  #allocation1 [shape = 'u32[144,128]{1,0:T(1,128)}', space=vmem, size = 0x12000, scoped, tag = 'internal scratch']
  %s0 = inlined_call_operand.vmem [shape: f32[2,32,8], index: 0, kind: input, shape index: {}]
  %s1 = inlined_call_operand.vmem [shape: f32[32,1], index: 1, kind: input, shape index: {}]
  %s2 = inlined_call_operand.vmem [shape: f32[32,1], index: 2, kind: input, shape index: {}]
  %s3 = inlined_call_operand.vmem [shape: bf16[96,32], index: 3, kind: input, shape index: {}]
  %s4 = inlined_call_operand.vmem [shape: f32[96,1], index: 4, kind: input, shape index: {}]
  %s5 = inlined_call_operand.vmem [shape: bf16[32,32], index: 5, kind: input, shape index: {}]
  %s6 = inlined_call_operand.vmem [shape: f32[32,1], index: 6, kind: input, shape index: {}]
  %s7 = inlined_call_operand.vmem [shape: f32[2,32,8], index: 7, kind: output, shape index: {}]
  %s8 = sld [smem:[#allocation0]]
  $region38: #{tpu_custom_call.1} parent=0
    _
  %s10 = ssub.s32 1, %s8
  %s11 = scalar_select 0, %s10, %s8
  // Predicated region
  $region2: #{tpu_custom_call.1} parent=0 // pred_check
    _
  $region3: #{tpu_custom_call.1} parent=0 // pred_check_branch
    %13 = sbr.rel (0) target = $region5
  $region4: #{tpu_custom_call.1} parent=0 // pred_region
    _
  $region5: #{tpu_custom_call.1} parent=0 // pred_fallthru
    _
  // Predicated region
  $region6: #{tpu_custom_call.1} parent=0 // pred_check
    _
  $region7: #{tpu_custom_call.1} parent=0 // pred_check_branch
    %15 = sbr.rel (0) target = $region9
  $region8: #{tpu_custom_call.1} parent=0 // pred_region
    _
  $region9: #{tpu_custom_call.1} parent=0 // pred_fallthru
    _
  // Predicated region
  $region10: #{tpu_custom_call.1} parent=0 // pred_check
    _
  $region11: #{tpu_custom_call.1} parent=0 // pred_check_branch
    %17 = sbr.rel (0) target = $region13
  $region12: #{tpu_custom_call.1} parent=0 // pred_region
    _
  $region13: #{tpu_custom_call.1} parent=0 // pred_fallthru
    _
  // Predicated region
  $region14: #{tpu_custom_call.1} parent=0 // pred_check
    _
  $region15: #{tpu_custom_call.1} parent=0 // pred_check_branch
    %19 = sbr.rel (0) target = $region17
  $region16: #{tpu_custom_call.1} parent=0 // pred_region
    _
  $region17: #{tpu_custom_call.1} parent=0 // pred_fallthru
    _
  // Predicated region
  $region18: #{tpu_custom_call.1} parent=0 // pred_check
    _
  $region19: #{tpu_custom_call.1} parent=0 // pred_check_branch
    %21 = sbr.rel (0) target = $region21
  $region20: #{tpu_custom_call.1} parent=0 // pred_region
    _
  $region21: #{tpu_custom_call.1} parent=0 // pred_fallthru
    _
  // Predicated region
  $region22: #{tpu_custom_call.1} parent=0 // pred_check
    _
  $region23: #{tpu_custom_call.1} parent=0 // pred_check_branch
    %23 = sbr.rel (0) target = $region25
  $region24: #{tpu_custom_call.1} parent=0 // pred_region
    _
  $region25: #{tpu_custom_call.1} parent=0 // pred_fallthru
    _
  // Predicated region
  $region26: #{tpu_custom_call.1} parent=0 // pred_check
    _
  $region27: #{tpu_custom_call.1} parent=0 // pred_check_branch
    %25 = sbr.rel (0) target = $region29
  $region28: #{tpu_custom_call.1} parent=0 // pred_region
    _
  $region29: #{tpu_custom_call.1} parent=0 // pred_fallthru
    _
  %v27 = vld [vmem:[%s0] sm:$0xff]
  %v28 = vld [vmem:[%s0 + $0x8] sm:$0xff]
  %v29 = vld [vmem:[%s0 + $0x10] sm:$0xff]
  %v30 = vld [vmem:[%s0 + $0x18] sm:$0xff]
  %v31 = vld [vmem:[%s0 + $0x20] sm:$0xff]
  %v32 = vld [vmem:[%s0 + $0x28] sm:$0xff]
  %v33 = vld [vmem:[%s0 + $0x30] sm:$0xff]
  %v34 = vld [vmem:[%s0 + $0x38] sm:$0xff]
  %vm35 = vcmask 64512
  %v36 = vsel %vm35, %v27, 0.0
  %37 = vadd.xlane.f32.xlu0 %v36
  %v38 = vpop.xlane.xlu0 %37
  %v39 = vsel %vm35, %v28, 0.0
  %40 = vadd.xlane.f32.xlu0 %v39
  %v41 = vpop.xlane.xlu0 %40
  %v42 = vsel %vm35, %v29, 0.0
  %43 = vadd.xlane.f32.xlu0 %v42
  %v44 = vpop.xlane.xlu0 %43
  %v45 = vsel %vm35, %v30, 0.0
  %46 = vadd.xlane.f32.xlu0 %v45
  %v47 = vpop.xlane.xlu0 %46
  %v48 = vsel %vm35, %v31, 0.0
  %49 = vadd.xlane.f32.xlu0 %v48
  %v50 = vpop.xlane.xlu0 %49
  %v51 = vsel %vm35, %v32, 0.0
  %52 = vadd.xlane.f32.xlu0 %v51
  %v53 = vpop.xlane.xlu0 %52
  %v54 = vsel %vm35, %v33, 0.0
  %55 = vadd.xlane.f32.xlu0 %v54
  %v56 = vpop.xlane.xlu0 %55
  %v57 = vsel %vm35, %v34, 0.0
  %58 = vadd.xlane.f32.xlu0 %v57
  %v59 = vpop.xlane.xlu0 %58
  %v60 = vmul.f32 %v27, %v27
  %v61 = vmul.f32 %v28, %v28
  %v62 = vmul.f32 %v29, %v29
  %v63 = vmul.f32 %v30, %v30
  %v64 = vmul.f32 %v31, %v31
  %v65 = vmul.f32 %v32, %v32
  %v66 = vmul.f32 %v33, %v33
  %v67 = vmul.f32 %v34, %v34
  %v68 = vsel %vm35, %v60, 0.0
  %69 = vadd.xlane.f32.xlu0 %v68
  %v70 = vpop.xlane.xlu0 %69
  %v71 = vsel %vm35, %v61, 0.0
  %72 = vadd.xlane.f32.xlu0 %v71
  %v73 = vpop.xlane.xlu0 %72
  %v74 = vsel %vm35, %v62, 0.0
  %75 = vadd.xlane.f32.xlu0 %v74
  %v76 = vpop.xlane.xlu0 %75
  %v77 = vsel %vm35, %v63, 0.0
  %78 = vadd.xlane.f32.xlu0 %v77
  %v79 = vpop.xlane.xlu0 %78
  %v80 = vsel %vm35, %v64, 0.0
  %81 = vadd.xlane.f32.xlu0 %v80
  %v82 = vpop.xlane.xlu0 %81
  %v83 = vsel %vm35, %v65, 0.0
  %84 = vadd.xlane.f32.xlu0 %v83
  %v85 = vpop.xlane.xlu0 %84
  %v86 = vsel %vm35, %v66, 0.0
  %87 = vadd.xlane.f32.xlu0 %v86
  %v88 = vpop.xlane.xlu0 %87
  %v89 = vsel %vm35, %v67, 0.0
  %90 = vadd.xlane.f32.xlu0 %v89
  %v91 = vpop.xlane.xlu0 %90
  %v92 = vmul.f32 %v38, 0.125
  %v93 = vmul.f32 %v41, 0.125
  %v94 = vmul.f32 %v44, 0.125
  %v95 = vmul.f32 %v47, 0.125
  %v96 = vmul.f32 %v50, 0.125
  %v97 = vmul.f32 %v53, 0.125
  %v98 = vmul.f32 %v56, 0.125
  %v99 = vmul.f32 %v59, 0.125
  %v100 = vmul.f32 %v70, 0.125
  %v101 = vmul.f32 %v73, 0.125
  %v102 = vmul.f32 %v76, 0.125
  %v103 = vmul.f32 %v79, 0.125
  %v104 = vmul.f32 %v82, 0.125
  %v105 = vmul.f32 %v85, 0.125
  %v106 = vmul.f32 %v88, 0.125
  %v107 = vmul.f32 %v91, 0.125
  %v108 = vmul.f32 %v92, %v92
  %v109 = vmul.f32 %v93, %v93
  %v110 = vmul.f32 %v94, %v94
  %v111 = vmul.f32 %v95, %v95
  %v112 = vmul.f32 %v96, %v96
  %v113 = vmul.f32 %v97, %v97
  %v114 = vmul.f32 %v98, %v98
  %v115 = vmul.f32 %v99, %v99
  %v116 = vsub.f32 %v100, %v108
  %v117 = vsub.f32 %v101, %v109
  %v118 = vsub.f32 %v102, %v110
  %v119 = vsub.f32 %v103, %v111
  %v120 = vsub.f32 %v104, %v112
  %v121 = vsub.f32 %v105, %v113
  %v122 = vsub.f32 %v106, %v114
  %v123 = vsub.f32 %v107, %v115
  %v124 = vmax.f32 %v116, 0.0
  %v125 = vmax.f32 %v117, 0.0
  %v126 = vmax.f32 %v118, 0.0
  %v127 = vmax.f32 %v119, 0.0
  %v128 = vmax.f32 %v120, 0.0
  %v129 = vmax.f32 %v121, 0.0
  %v130 = vmax.f32 %v122, 0.0
  %v131 = vmax.f32 %v123, 0.0
  %v132 = vadd.f32 %v124, 1e-06
  %v133 = vadd.f32 %v125, 1e-06
  %v134 = vadd.f32 %v126, 1e-06
  %v135 = vadd.f32 %v127, 1e-06
  %v136 = vadd.f32 %v128, 1e-06
  %v137 = vadd.f32 %v129, 1e-06
  %v138 = vadd.f32 %v130, 1e-06
  %v139 = vadd.f32 %v131, 1e-06
  %v140 = vrsqrt.pop %v132
  %v141 = vrsqrt.pop %v133
  %v142 = vrsqrt.pop %v134
  %v143 = vrsqrt.pop %v135
  %v144 = vrsqrt.pop %v136
  %v145 = vrsqrt.pop %v137
  %v146 = vrsqrt.pop %v138
  %v147 = vrsqrt.pop %v139
  %v148 = vld [vmem:[%s1] sm:$0xff]
  %v149 = vld [vmem:[%s1 + $0x8] sm:$0xff]
  %v150 = vld [vmem:[%s1 + $0x10] sm:$0xff]
  %v151 = vld [vmem:[%s1 + $0x18] sm:$0xff]
  %v152 = vmul.f32 %v148, %v140
  %v153 = vmul.f32 %v149, %v141
  %v154 = vmul.f32 %v150, %v142
  %v155 = vmul.f32 %v151, %v143
  %v156 = vmul.f32 %v148, %v144
  %v157 = vmul.f32 %v149, %v145
  %v158 = vmul.f32 %v150, %v146
  %v159 = vmul.f32 %v151, %v147
  %v160 = vld [vmem:[%s2] sm:$0xff]
  %v161 = vld [vmem:[%s2 + $0x8] sm:$0xff]
  %v162 = vld [vmem:[%s2 + $0x10] sm:$0xff]
  %v163 = vld [vmem:[%s2 + $0x18] sm:$0xff]
  %v164 = vmul.f32 %v92, %v152
  %v165 = vmul.f32 %v93, %v153
  %v166 = vmul.f32 %v94, %v154
  %v167 = vmul.f32 %v95, %v155
  %v168 = vmul.f32 %v96, %v156
  %v169 = vmul.f32 %v97, %v157
  %v170 = vmul.f32 %v98, %v158
  %v171 = vmul.f32 %v99, %v159
  %v172 = vsub.f32 %v160, %v164
  %v173 = vsub.f32 %v161, %v165
  %v174 = vsub.f32 %v162, %v166
  %v175 = vsub.f32 %v163, %v167
  %v176 = vsub.f32 %v160, %v168
  %v177 = vsub.f32 %v161, %v169
  %v178 = vsub.f32 %v162, %v170
  %v179 = vsub.f32 %v163, %v171
  %181 = vset.pattern.permute.xlu0 0
  %182 = vperm.xlu0 %181, %v152
  %v183 = vpop.permute.xlu0 %182
  %186 = vset.pattern.permute.xlu0 0
  %187 = vperm.xlu0 %186, %v153
  %v188 = vpop.permute.xlu0 %187
  %191 = vset.pattern.permute.xlu0 0
  %192 = vperm.xlu0 %191, %v154
  %v193 = vpop.permute.xlu0 %192
  %196 = vset.pattern.permute.xlu0 0
  %197 = vperm.xlu0 %196, %v155
  %v198 = vpop.permute.xlu0 %197
  %201 = vset.pattern.permute.xlu0 0
  %202 = vperm.xlu0 %201, %v156
  %v203 = vpop.permute.xlu0 %202
  %206 = vset.pattern.permute.xlu0 0
  %207 = vperm.xlu0 %206, %v157
  %v208 = vpop.permute.xlu0 %207
  %211 = vset.pattern.permute.xlu0 0
  %212 = vperm.xlu0 %211, %v158
  %v213 = vpop.permute.xlu0 %212
  %216 = vset.pattern.permute.xlu0 0
  %217 = vperm.xlu0 %216, %v159
  %v218 = vpop.permute.xlu0 %217
  %v220 = vmul.f32 %v27, %v183
  %v221 = vmul.f32 %v28, %v188
  %v222 = vmul.f32 %v29, %v193
  %v223 = vmul.f32 %v30, %v198
  %v224 = vmul.f32 %v31, %v203
  %v225 = vmul.f32 %v32, %v208
  %v226 = vmul.f32 %v33, %v213
  %v227 = vmul.f32 %v34, %v218
  %229 = vset.pattern.permute.xlu0 0
  %230 = vperm.xlu0 %229, %v172
  %v231 = vpop.permute.xlu0 %230
  %234 = vset.pattern.permute.xlu0 0
  %235 = vperm.xlu0 %234, %v173
  %v236 = vpop.permute.xlu0 %235
  %239 = vset.pattern.permute.xlu0 0
  %240 = vperm.xlu0 %239, %v174
  %v241 = vpop.permute.xlu0 %240
  %244 = vset.pattern.permute.xlu0 0
  %245 = vperm.xlu0 %244, %v175
  %v246 = vpop.permute.xlu0 %245
  %249 = vset.pattern.permute.xlu0 0
  %250 = vperm.xlu0 %249, %v176
  %v251 = vpop.permute.xlu0 %250
  %254 = vset.pattern.permute.xlu0 0
  %255 = vperm.xlu0 %254, %v177
  %v256 = vpop.permute.xlu0 %255
  %259 = vset.pattern.permute.xlu0 0
  %260 = vperm.xlu0 %259, %v178
  %v261 = vpop.permute.xlu0 %260
  %264 = vset.pattern.permute.xlu0 0
  %265 = vperm.xlu0 %264, %v179
  %v266 = vpop.permute.xlu0 %265
  %v268 = vadd.f32 %v220, %v231
  %v269 = vadd.f32 %v221, %v236
  %v270 = vadd.f32 %v222, %v241
  %v271 = vadd.f32 %v223, %v246
  %v272 = vadd.f32 %v224, %v251
  %v273 = vadd.f32 %v225, %v256
  %v274 = vadd.f32 %v226, %v261
  %v275 = vadd.f32 %v227, %v266
  %v276 = vpack.c.bf16 %v269, %v268
  %v277 = vpack.c.bf16 %v271, %v270
  %v278 = vpack.c.bf16 %v273, %v272
  %v279 = vpack.c.bf16 %v275, %v274
  %v280 = vld [vmem:[%s3] sm:$0xf]
  %v281 = vld [vmem:[%s3 + $0x4] sm:$0xf]
  %v282 = vld [vmem:[%s3 + $0x8] sm:$0xf]
  %v283 = vld [vmem:[%s3 + $0xc] sm:$0xf]
  %v284 = vld [vmem:[%s3 + $0x10] sm:$0xf]
  %v285 = vld [vmem:[%s3 + $0x14] sm:$0xf]
  %v286 = vld [vmem:[%s3 + $0x18] sm:$0xf]
  %v287 = vld [vmem:[%s3 + $0x1c] sm:$0xf]
  %v288 = vld [vmem:[%s3 + $0x20] sm:$0xf]
  %v289 = vld [vmem:[%s3 + $0x24] sm:$0xf]
  %v290 = vld [vmem:[%s3 + $0x28] sm:$0xf]
  %v291 = vld [vmem:[%s3 + $0x2c] sm:$0xf]
  %v292 = vld [vmem:[%s4] sm:$0xff]
  %v293 = vld [vmem:[%s4 + $0x8] sm:$0xff]
  %v294 = vld [vmem:[%s4 + $0x10] sm:$0xff]
  %v295 = vld [vmem:[%s4 + $0x18] sm:$0xff]
  %v296 = vld [vmem:[%s4 + $0x20] sm:$0xff]
  %v297 = vld [vmem:[%s4 + $0x28] sm:$0xff]
  %v298 = vld [vmem:[%s4 + $0x30] sm:$0xff]
  %v299 = vld [vmem:[%s4 + $0x38] sm:$0xff]
  %v300 = vld [vmem:[%s4 + $0x40] sm:$0xff]
  %v301 = vld [vmem:[%s4 + $0x48] sm:$0xff]
  %v302 = vld [vmem:[%s4 + $0x50] sm:$0xff]
  %v303 = vld [vmem:[%s4 + $0x58] sm:$0xff]
  %v304 = vld [vmem:[%s5] sm:$0xf]
  %v305 = vld [vmem:[%s5 + $0x4] sm:$0xf]
  %v306 = vld [vmem:[%s5 + $0x8] sm:$0xf]
  %v307 = vld [vmem:[%s5 + $0xc] sm:$0xf]
  %v308 = vld [vmem:[%s6] sm:$0xff]
  %v309 = vld [vmem:[%s6 + $0x8] sm:$0xff]
  %v310 = vld [vmem:[%s6 + $0x10] sm:$0xff]
  %v311 = vld [vmem:[%s6 + $0x18] sm:$0xff]
  %313 = vset.pattern.permute.xlu0 0
  %314 = vperm.xlu0 %313, %v292
  %v315 = vpop.permute.xlu0 %314
  %318 = vset.pattern.permute.xlu0 0
  %319 = vperm.xlu0 %318, %v293
  %v320 = vpop.permute.xlu0 %319
  %323 = vset.pattern.permute.xlu0 0
  %324 = vperm.xlu0 %323, %v294
  %v325 = vpop.permute.xlu0 %324
  %328 = vset.pattern.permute.xlu0 0
  %329 = vperm.xlu0 %328, %v295
  %v330 = vpop.permute.xlu0 %329
  %333 = vset.pattern.permute.xlu0 0
  %334 = vperm.xlu0 %333, %v296
  %v335 = vpop.permute.xlu0 %334
  %338 = vset.pattern.permute.xlu0 0
  %339 = vperm.xlu0 %338, %v297
  %v340 = vpop.permute.xlu0 %339
  %343 = vset.pattern.permute.xlu0 0
  %344 = vperm.xlu0 %343, %v298
  %v345 = vpop.permute.xlu0 %344
  %348 = vset.pattern.permute.xlu0 0
  %349 = vperm.xlu0 %348, %v299
  %v350 = vpop.permute.xlu0 %349
  %353 = vset.pattern.permute.xlu0 0
  %354 = vperm.xlu0 %353, %v300
  %v355 = vpop.permute.xlu0 %354
  %358 = vset.pattern.permute.xlu0 0
  %359 = vperm.xlu0 %358, %v301
  %v360 = vpop.permute.xlu0 %359
  %363 = vset.pattern.permute.xlu0 0
  %364 = vperm.xlu0 %363, %v302
  %v365 = vpop.permute.xlu0 %364
  %368 = vset.pattern.permute.xlu0 0
  %369 = vperm.xlu0 %368, %v303
  %v370 = vpop.permute.xlu0 %369
  %v384 = vunpack.c.l.b16 %v280
  %v385 = vunpack.c.l.b16 %v281
  %v386 = vunpack.c.l.b16 %v282
  %v387 = vunpack.c.l.b16 %v283
  %v388 = vunpack.c.l.b16 %v284
  %v389 = vunpack.c.l.b16 %v285
  %v390 = vunpack.c.l.b16 %v286
  %v391 = vunpack.c.l.b16 %v287
  %v392 = vunpack.c.l.b16 %v288
  %v393 = vunpack.c.l.b16 %v289
  %v394 = vunpack.c.l.b16 %v290
  %v395 = vunpack.c.l.b16 %v291
  %v396 = vpack.c.b16 %v385, %v384
  %v397 = vpack.c.b16 %v387, %v386
  %v398 = vpack.c.b16 %v389, %v388
  %v399 = vpack.c.b16 %v391, %v390
  %v400 = vpack.c.b16 %v393, %v392
  %v401 = vpack.c.b16 %v395, %v394
  %vm402 = vcmask 261120
  %v404 = vsel %vm402, %v396, 0
  %v407 = vsel %vm402, %v397, 0
  %v410 = vsel %vm402, %v398, 0
  %v413 = vsel %vm402, %v399, 0
  %v416 = vsel %vm402, %v400, 0
  %v419 = vsel %vm402, %v401, 0
  %421 = vmatprep.subr.bf16.mxu0 0
  %422 = vmatpush1.bf16.msra.mxu0 %v276
  %423 = vmatprep.subr.bf16.mxu0 0
  %424 = vmatpush1.bf16.msra.mxu0 %v277
  %425 = vmatprep.subr.bf16.mxu0 0
  %426 = vmatpush1.bf16.msra.mxu0 0
  %427 = vmatprep.subr.bf16.mxu0 0
  %428 = vmatpush1.bf16.msra.mxu0 0
  %429 = vmatprep.subr.bf16.mxu0 0
  %430 = vmatpush1.bf16.msra.mxu0 0
  %431 = vmatprep.subr.bf16.mxu0 0
  %432 = vmatpush1.bf16.msra.mxu0 0
  %433 = vmatprep.subr.bf16.mxu0 0
  %434 = vmatpush1.bf16.msra.mxu0 0
  %435 = vmatprep.subr.bf16.mxu0 0
  %436 = vmatpush1.bf16.msra.mxu0 0
  %437 = vmatprep.subr.bf16.mxu0 0
  %438 = vmatpush1.bf16.msra.mxu0 0
  %439 = vmatprep.subr.bf16.mxu0 0
  %440 = vmatpush1.bf16.msra.mxu0 0
  %441 = vmatprep.subr.bf16.mxu0 0
  %442 = vmatpush1.bf16.msra.mxu0 0
  %443 = vmatprep.subr.bf16.mxu0 0
  %444 = vmatpush1.bf16.msra.mxu0 0
  %445 = vmatprep.subr.bf16.mxu0 0
  %446 = vmatpush1.bf16.msra.mxu0 0
  %447 = vmatprep.subr.bf16.mxu0 0
  %448 = vmatpush1.bf16.msra.mxu0 0
  %449 = vmatprep.subr.bf16.mxu0 0
  %450 = vmatpush1.bf16.msra.mxu0 0
  %451 = vmatprep.subr.bf16.mxu0 0
  %452 = vmatpush1.bf16.msra.mxu0 0
  %453 = vmatprep.mubr.bf16.mxu0 0
  %454 = vmatmul.mubr.bf16.gmra.mrb[0].mxu0 %v404
  %v455 = vpop.f32.mrb[0].mxu0
  %v456 = vadd.f32 %v315, %v455
  %v457 = vpop.f32.mrb[0].mxu0
  %v458 = vpop.f32.mrb[0].mxu0
  %v459 = vadd.f32 %v320, %v458
  %v460 = vpop.f32.mrb[0].mxu0
  %461 = vmatprep.mubr.bf16.mxu0 0
  %462 = vmatmul.mubr.bf16.gmra.mrb[0].mxu0 %v407
  %v463 = vpop.f32.mrb[0].mxu0
  %v464 = vadd.f32 %v325, %v463
  %v465 = vpop.f32.mrb[0].mxu0
  %v466 = vpop.f32.mrb[0].mxu0
  %v467 = vadd.f32 %v330, %v466
  %v468 = vpop.f32.mrb[0].mxu0
  %469 = vmatprep.mubr.bf16.mxu0 0
  %470 = vmatmul.mubr.bf16.gmra.mrb[0].mxu0 %v410
  %v471 = vpop.f32.mrb[0].mxu0
  %v472 = vadd.f32 %v335, %v471
  %v473 = vpop.f32.mrb[0].mxu0
  %v474 = vpop.f32.mrb[0].mxu0
  %v475 = vadd.f32 %v340, %v474
  %v476 = vpop.f32.mrb[0].mxu0
  %477 = vmatprep.mubr.bf16.mxu0 0
  %478 = vmatmul.mubr.bf16.gmra.mrb[0].mxu0 %v413
  %v479 = vpop.f32.mrb[0].mxu0
  %v480 = vadd.f32 %v345, %v479
  %v481 = vpop.f32.mrb[0].mxu0
  %v482 = vpop.f32.mrb[0].mxu0
  %v483 = vadd.f32 %v350, %v482
  %v484 = vpop.f32.mrb[0].mxu0
  %485 = vmatprep.mubr.bf16.mxu0 0
  %486 = vmatmul.mubr.bf16.gmra.mrb[0].mxu0 %v416
  %v487 = vpop.f32.mrb[0].mxu0
  %v488 = vadd.f32 %v355, %v487
  %v489 = vpop.f32.mrb[0].mxu0
  %v490 = vpop.f32.mrb[0].mxu0
  %v491 = vadd.f32 %v360, %v490
  %v492 = vpop.f32.mrb[0].mxu0
  %493 = vmatprep.mubr.bf16.mxu0 0
  %494 = vmatmul.mubr.bf16.gmra.mrb[0].mxu0 %v419
  %v495 = vpop.f32.mrb[0].mxu0
  %v496 = vadd.f32 %v365, %v495
  %v497 = vpop.f32.mrb[0].mxu0
  %v498 = vpop.f32.mrb[0].mxu0
  %v499 = vadd.f32 %v370, %v498
  %v500 = vpop.f32.mrb[0].mxu0
  %501 = vdwg.mxu0
  %v502 = vmul.f32 %v456, 0.17677669
  %v503 = vmul.f32 %v459, 0.17677669
  %v504 = vmul.f32 %v464, 0.17677669
  %v505 = vmul.f32 %v467, 0.17677669
  %v506 = vpack.c.bf16 %v503, %v502
  %v507 = vpack.c.bf16 %v505, %v504
  %v508 = vpack.c.bf16 %v475, %v472
  %v509 = vpack.c.bf16 %v483, %v480
  %v510 = vpack.c.bf16 %v491, %v488
  %v511 = vpack.c.bf16 %v499, %v496
  %512 = vxpose.xlu0.c.b16.start [1/8] %v506, 128
  %513 = vxpose.xlu0.c.b16.cont [2/8] %v507, 128
  %514 = vxpose.xlu0.c.b16.cont [3/8] 0, 128
  %515 = vxpose.xlu0.c.b16.cont [4/8] 0, 128
  %516 = vxpose.xlu0.c.b16.cont [5/8] 0, 128
  %517 = vxpose.xlu0.c.b16.cont [6/8] 0, 128
  %518 = vxpose.xlu0.c.b16.cont [7/8] 0, 128
  %519 = vxpose.xlu0.c.b16.end [8/8] 0, 128
  %v520 = vpop.trf.xlu0
  %v521 = vpop.trf.xlu0
  %v522 = vpop.trf.xlu0
  %v523 = vpop.trf.xlu0
  %v524 = vpop.trf.xlu0
  %v525 = vpop.trf.xlu0
  %v526 = vpop.trf.xlu0
  %v527 = vpop.trf.xlu0
  %v529 = vsel %vm402, %v520, 0
  %531 = vmatprep.subr.bf16.mxu0 0
  %532 = vmatpush1.bf16.msra.mxu0 %v508
  %533 = vmatprep.subr.bf16.mxu0 0
  %534 = vmatpush1.bf16.msra.mxu0 %v509
  %535 = vmatprep.subr.bf16.mxu0 0
  %536 = vmatpush1.bf16.msra.mxu0 0
  %537 = vmatprep.subr.bf16.mxu0 0
  %538 = vmatpush1.bf16.msra.mxu0 0
  %539 = vmatprep.subr.bf16.mxu0 0
  %540 = vmatpush1.bf16.msra.mxu0 0
  %541 = vmatprep.subr.bf16.mxu0 0
  %542 = vmatpush1.bf16.msra.mxu0 0
  %543 = vmatprep.subr.bf16.mxu0 0
  %544 = vmatpush1.bf16.msra.mxu0 0
  %545 = vmatprep.subr.bf16.mxu0 0
  %546 = vmatpush1.bf16.msra.mxu0 0
  %547 = vmatprep.subr.bf16.mxu0 0
  %548 = vmatpush1.bf16.msra.mxu0 0
  %549 = vmatprep.subr.bf16.mxu0 0
  %550 = vmatpush1.bf16.msra.mxu0 0
  %551 = vmatprep.subr.bf16.mxu0 0
  %552 = vmatpush1.bf16.msra.mxu0 0
  %553 = vmatprep.subr.bf16.mxu0 0
  %554 = vmatpush1.bf16.msra.mxu0 0
  %555 = vmatprep.subr.bf16.mxu0 0
  %556 = vmatpush1.bf16.msra.mxu0 0
  %557 = vmatprep.subr.bf16.mxu0 0
  %558 = vmatpush1.bf16.msra.mxu0 0
  %559 = vmatprep.subr.bf16.mxu0 0
  %560 = vmatpush1.bf16.msra.mxu0 0
  %561 = vmatprep.subr.bf16.mxu0 0
  %562 = vmatpush1.bf16.msra.mxu0 0
  %563 = vmatprep.mubr.bf16.mxu0 0
  %564 = vmatmul.mubr.bf16.gmra.mrb[0].mxu0 %v529
  %v565 = vpop.f32.mrb[0].mxu0
  %v566 = vadd.f32 0.0, %v565
  %v567 = vpop.f32.mrb[0].mxu0
  %v568 = vpop.f32.mrb[0].mxu0
  %v569 = vpop.f32.mrb[0].mxu0
  %570 = vdwg.mxu0
  %v571 = vsel %vm35, %v566, -inf
  %572 = vmax.xlane.f32.xlu0 %v571
  %v573 = vpop.xlane.xlu0 %572
  %v574 = vsub.f32 %v566, %v573
  %v575 = vmul.f32 %v574, 1.442695
  %v576 = vpow.pop %v575
  %v577 = vsel %vm35, %v576, 0.0
  %578 = vadd.xlane.f32.xlu0 %v577
  %v579 = vpop.xlane.xlu0 %578
  %v580 = vrcp.pop %v579
  %v581 = vmul.f32 %v576, %v580
  %v582 = vpack.c.bf16 %v581, %v581
  %v584 = vsel %vm35, %v510, 0
  %v587 = vsel %vm35, %v511, 0
  %v590 = vsel %vm35, %v582, 0
  %592 = vmatprep.subr.bf16.mxu0 0
  %593 = vmatpush1.bf16.xpose.msra.mxu0 %v590
  %594 = vmatprep.subr.bf16.mxu0 0
  %595 = vmatpush1.bf16.xpose.msra.mxu0 0
  %596 = vmatprep.subr.bf16.mxu0 0
  %597 = vmatpush1.bf16.xpose.msra.mxu0 0
  %598 = vmatprep.subr.bf16.mxu0 0
  %599 = vmatpush1.bf16.xpose.msra.mxu0 0
  %600 = vmatprep.subr.bf16.mxu0 0
  %601 = vmatpush1.bf16.xpose.msra.mxu0 0
  %602 = vmatprep.subr.bf16.mxu0 0
  %603 = vmatpush1.bf16.xpose.msra.mxu0 0
  %604 = vmatprep.subr.bf16.mxu0 0
  %605 = vmatpush1.bf16.xpose.msra.mxu0 0
  %606 = vmatprep.subr.bf16.mxu0 0
  %607 = vmatpush1.bf16.xpose.msra.mxu0 0
  %608 = vmatprep.subr.bf16.mxu0 0
  %609 = vmatpush1.bf16.xpose.msra.mxu0 0
  %610 = vmatprep.subr.bf16.mxu0 0
  %611 = vmatpush1.bf16.xpose.msra.mxu0 0
  %612 = vmatprep.subr.bf16.mxu0 0
  %613 = vmatpush1.bf16.xpose.msra.mxu0 0
  %614 = vmatprep.subr.bf16.mxu0 0
  %615 = vmatpush1.bf16.xpose.msra.mxu0 0
  %616 = vmatprep.subr.bf16.mxu0 0
  %617 = vmatpush1.bf16.xpose.msra.mxu0 0
  %618 = vmatprep.subr.bf16.mxu0 0
  %619 = vmatpush1.bf16.xpose.msra.mxu0 0
  %620 = vmatprep.subr.bf16.mxu0 0
  %621 = vmatpush1.bf16.xpose.msra.mxu0 0
  %622 = vmatprep.subr.bf16.mxu0 0
  %623 = vmatpush1.bf16.xpose.msra.mxu0 0
  %624 = vmatprep.mubr.bf16.mxu0 0
  %625 = vmatmul.mubr.bf16.gmra.mrb[0].mxu0 %v584
  %v626 = vpop.f32.mrb[0].mxu0
  %v627 = vadd.f32 0.0, %v626
  %v628 = vpop.f32.mrb[0].mxu0
  %v629 = vpop.f32.mrb[0].mxu0
  %v630 = vadd.f32 0.0, %v629
  %v631 = vpop.f32.mrb[0].mxu0
  %632 = vmatprep.mubr.bf16.mxu0 0
  %633 = vmatmul.mubr.bf16.gmra.mrb[0].mxu0 %v587
  %v634 = vpop.f32.mrb[0].mxu0
  %v635 = vadd.f32 0.0, %v634
  %v636 = vpop.f32.mrb[0].mxu0
  %v637 = vpop.f32.mrb[0].mxu0
  %v638 = vadd.f32 0.0, %v637
  %v639 = vpop.f32.mrb[0].mxu0
  %640 = vdwg.mxu0
  %v641 = vpack.c.bf16 %v630, %v627
  %v642 = vpack.c.bf16 %v638, %v635
  %644 = vset.pattern.permute.xlu0 0
  %645 = vperm.xlu0 %644, %v308
  %v646 = vpop.permute.xlu0 %645
  %649 = vset.pattern.permute.xlu0 0
  %650 = vperm.xlu0 %649, %v309
  %v651 = vpop.permute.xlu0 %650
  %654 = vset.pattern.permute.xlu0 0
  %655 = vperm.xlu0 %654, %v310
  %v656 = vpop.permute.xlu0 %655
  %659 = vset.pattern.permute.xlu0 0
  %660 = vperm.xlu0 %659, %v311
  %v661 = vpop.permute.xlu0 %660
  %v667 = vunpack.c.l.b16 %v304
  %v668 = vunpack.c.l.b16 %v305
  %v669 = vunpack.c.l.b16 %v306
  %v670 = vunpack.c.l.b16 %v307
  %v671 = vpack.c.b16 %v668, %v667
  %v672 = vpack.c.b16 %v670, %v669
  %v674 = vsel %vm402, %v671, 0
  %v677 = vsel %vm402, %v672, 0
  %679 = vmatprep.subr.bf16.mxu0 0
  %680 = vmatpush1.bf16.msra.mxu0 %v641
  %681 = vmatprep.subr.bf16.mxu0 0
  %682 = vmatpush1.bf16.msra.mxu0 %v642
  %683 = vmatprep.subr.bf16.mxu0 0
  %684 = vmatpush1.bf16.msra.mxu0 0
  %685 = vmatprep.subr.bf16.mxu0 0
  %686 = vmatpush1.bf16.msra.mxu0 0
  %687 = vmatprep.subr.bf16.mxu0 0
  %688 = vmatpush1.bf16.msra.mxu0 0
  %689 = vmatprep.subr.bf16.mxu0 0
  %690 = vmatpush1.bf16.msra.mxu0 0
  %691 = vmatprep.subr.bf16.mxu0 0
  %692 = vmatpush1.bf16.msra.mxu0 0
  %693 = vmatprep.subr.bf16.mxu0 0
  %694 = vmatpush1.bf16.msra.mxu0 0
  %695 = vmatprep.subr.bf16.mxu0 0
  %696 = vmatpush1.bf16.msra.mxu0 0
  %697 = vmatprep.subr.bf16.mxu0 0
  %698 = vmatpush1.bf16.msra.mxu0 0
  %699 = vmatprep.subr.bf16.mxu0 0
  %700 = vmatpush1.bf16.msra.mxu0 0
  %701 = vmatprep.subr.bf16.mxu0 0
  %702 = vmatpush1.bf16.msra.mxu0 0
  %703 = vmatprep.subr.bf16.mxu0 0
  %704 = vmatpush1.bf16.msra.mxu0 0
  %705 = vmatprep.subr.bf16.mxu0 0
  %706 = vmatpush1.bf16.msra.mxu0 0
  %707 = vmatprep.subr.bf16.mxu0 0
  %708 = vmatpush1.bf16.msra.mxu0 0
  %709 = vmatprep.subr.bf16.mxu0 0
  %710 = vmatpush1.bf16.msra.mxu0 0
  %711 = vmatprep.mubr.bf16.mxu0 0
  %712 = vmatmul.mubr.bf16.gmra.mrb[0].mxu0 %v674
  %v713 = vpop.f32.mrb[0].mxu0
  %v714 = vadd.f32 %v646, %v713
  %v715 = vpop.f32.mrb[0].mxu0
  %v716 = vpop.f32.mrb[0].mxu0
  %v717 = vadd.f32 %v651, %v716
  %v718 = vpop.f32.mrb[0].mxu0
  %719 = vmatprep.mubr.bf16.mxu0 0
  %720 = vmatmul.mubr.bf16.gmra.mrb[0].mxu0 %v677
  %v721 = vpop.f32.mrb[0].mxu0
  %v722 = vadd.f32 %v656, %v721
  %v723 = vpop.f32.mrb[0].mxu0
  %v724 = vpop.f32.mrb[0].mxu0
  %v725 = vadd.f32 %v661, %v724
  %v726 = vpop.f32.mrb[0].mxu0
  %727 = vdwg.mxu0
  %v728 = vadd.f32 %v27, %v714
  %v729 = vadd.f32 %v28, %v717
  %v730 = vadd.f32 %v29, %v722
  %v731 = vadd.f32 %v30, %v725
  %732 = vst.msk [vmem:[%s7] sm:$0xff] %vm35, %v728
  %733 = vst.msk [vmem:[%s7 + $0x8] sm:$0xff] %vm35, %v729
  %734 = vst.msk [vmem:[%s7 + $0x10] sm:$0xff] %vm35, %v730
  %735 = vst.msk [vmem:[%s7 + $0x18] sm:$0xff] %vm35, %v731
  %736 = vmatprep.subr.bf16.mxu0 0
  %737 = vmatpush1.bf16.msra.mxu0 %v278
  %738 = vmatprep.subr.bf16.mxu0 0
  %739 = vmatpush1.bf16.msra.mxu0 %v279
  %740 = vmatprep.subr.bf16.mxu0 0
  %741 = vmatpush1.bf16.msra.mxu0 0
  %742 = vmatprep.subr.bf16.mxu0 0
  %743 = vmatpush1.bf16.msra.mxu0 0
  %744 = vmatprep.subr.bf16.mxu0 0
  %745 = vmatpush1.bf16.msra.mxu0 0
  %746 = vmatprep.subr.bf16.mxu0 0
  %747 = vmatpush1.bf16.msra.mxu0 0
  %748 = vmatprep.subr.bf16.mxu0 0
  %749 = vmatpush1.bf16.msra.mxu0 0
  %750 = vmatprep.subr.bf16.mxu0 0
  %751 = vmatpush1.bf16.msra.mxu0 0
  %752 = vmatprep.subr.bf16.mxu0 0
  %753 = vmatpush1.bf16.msra.mxu0 0
  %754 = vmatprep.subr.bf16.mxu0 0
  %755 = vmatpush1.bf16.msra.mxu0 0
  %756 = vmatprep.subr.bf16.mxu0 0
  %757 = vmatpush1.bf16.msra.mxu0 0
  %758 = vmatprep.subr.bf16.mxu0 0
  %759 = vmatpush1.bf16.msra.mxu0 0
  %760 = vmatprep.subr.bf16.mxu0 0
  %761 = vmatpush1.bf16.msra.mxu0 0
  %762 = vmatprep.subr.bf16.mxu0 0
  %763 = vmatpush1.bf16.msra.mxu0 0
  %764 = vmatprep.subr.bf16.mxu0 0
  %765 = vmatpush1.bf16.msra.mxu0 0
  %766 = vmatprep.subr.bf16.mxu0 0
  %767 = vmatpush1.bf16.msra.mxu0 0
  %768 = vmatprep.mubr.bf16.mxu0 0
  %769 = vmatmul.mubr.bf16.gmra.mrb[0].mxu0 %v404
  %v770 = vpop.f32.mrb[0].mxu0
  %v771 = vadd.f32 %v315, %v770
  %v772 = vpop.f32.mrb[0].mxu0
  %v773 = vpop.f32.mrb[0].mxu0
  %v774 = vadd.f32 %v320, %v773
  %v775 = vpop.f32.mrb[0].mxu0
  %776 = vmatprep.mubr.bf16.mxu0 0
  %777 = vmatmul.mubr.bf16.gmra.mrb[0].mxu0 %v407
  %v778 = vpop.f32.mrb[0].mxu0
  %v779 = vadd.f32 %v325, %v778
  %v780 = vpop.f32.mrb[0].mxu0
  %v781 = vpop.f32.mrb[0].mxu0
  %v782 = vadd.f32 %v330, %v781
  %v783 = vpop.f32.mrb[0].mxu0
  %784 = vmatprep.mubr.bf16.mxu0 0
  %785 = vmatmul.mubr.bf16.gmra.mrb[0].mxu0 %v410
  %v786 = vpop.f32.mrb[0].mxu0
  %v787 = vadd.f32 %v335, %v786
  %v788 = vpop.f32.mrb[0].mxu0
  %v789 = vpop.f32.mrb[0].mxu0
  %v790 = vadd.f32 %v340, %v789
  %v791 = vpop.f32.mrb[0].mxu0
  %792 = vmatprep.mubr.bf16.mxu0 0
  %793 = vmatmul.mubr.bf16.gmra.mrb[0].mxu0 %v413
  %v794 = vpop.f32.mrb[0].mxu0
  %v795 = vadd.f32 %v345, %v794
  %v796 = vpop.f32.mrb[0].mxu0
  %v797 = vpop.f32.mrb[0].mxu0
  %v798 = vadd.f32 %v350, %v797
  %v799 = vpop.f32.mrb[0].mxu0
  %800 = vmatprep.mubr.bf16.mxu0 0
  %801 = vmatmul.mubr.bf16.gmra.mrb[0].mxu0 %v416
  %v802 = vpop.f32.mrb[0].mxu0
  %v803 = vadd.f32 %v355, %v802
  %v804 = vpop.f32.mrb[0].mxu0
  %v805 = vpop.f32.mrb[0].mxu0
  %v806 = vadd.f32 %v360, %v805
  %v807 = vpop.f32.mrb[0].mxu0
  %808 = vmatprep.mubr.bf16.mxu0 0
  %809 = vmatmul.mubr.bf16.gmra.mrb[0].mxu0 %v419
  %v810 = vpop.f32.mrb[0].mxu0
  %v811 = vadd.f32 %v365, %v810
  %v812 = vpop.f32.mrb[0].mxu0
  %v813 = vpop.f32.mrb[0].mxu0
  %v814 = vadd.f32 %v370, %v813
  %v815 = vpop.f32.mrb[0].mxu0
  %816 = vdwg.mxu0
  %v817 = vmul.f32 %v771, 0.17677669
  %v818 = vmul.f32 %v774, 0.17677669
  %v819 = vmul.f32 %v779, 0.17677669
  %v820 = vmul.f32 %v782, 0.17677669
  %v821 = vpack.c.bf16 %v818, %v817
  %v822 = vpack.c.bf16 %v820, %v819
  %v823 = vpack.c.bf16 %v790, %v787
  %v824 = vpack.c.bf16 %v798, %v795
  %v825 = vpack.c.bf16 %v806, %v803
  %v826 = vpack.c.bf16 %v814, %v811
  %827 = vxpose.xlu0.c.b16.start [1/8] %v821, 128
  %828 = vxpose.xlu0.c.b16.cont [2/8] %v822, 128
  %829 = vxpose.xlu0.c.b16.cont [3/8] 0, 128
  %830 = vxpose.xlu0.c.b16.cont [4/8] 0, 128
  %831 = vxpose.xlu0.c.b16.cont [5/8] 0, 128
  %832 = vxpose.xlu0.c.b16.cont [6/8] 0, 128
  %833 = vxpose.xlu0.c.b16.cont [7/8] 0, 128
  %834 = vxpose.xlu0.c.b16.end [8/8] 0, 128
  %v835 = vpop.trf.xlu0
  %v836 = vpop.trf.xlu0
  %v837 = vpop.trf.xlu0
  %v838 = vpop.trf.xlu0
  %v839 = vpop.trf.xlu0
  %v840 = vpop.trf.xlu0
  %v841 = vpop.trf.xlu0
  %v842 = vpop.trf.xlu0
  %v844 = vsel %vm402, %v835, 0
  %846 = vmatprep.subr.bf16.mxu0 0
  %847 = vmatpush1.bf16.msra.mxu0 %v823
  %848 = vmatprep.subr.bf16.mxu0 0
  %849 = vmatpush1.bf16.msra.mxu0 %v824
  %850 = vmatprep.subr.bf16.mxu0 0
  %851 = vmatpush1.bf16.msra.mxu0 0
  %852 = vmatprep.subr.bf16.mxu0 0
  %853 = vmatpush1.bf16.msra.mxu0 0
  %854 = vmatprep.subr.bf16.mxu0 0
  %855 = vmatpush1.bf16.msra.mxu0 0
  %856 = vmatprep.subr.bf16.mxu0 0
  %857 = vmatpush1.bf16.msra.mxu0 0
  %858 = vmatprep.subr.bf16.mxu0 0
  %859 = vmatpush1.bf16.msra.mxu0 0
  %860 = vmatprep.subr.bf16.mxu0 0
  %861 = vmatpush1.bf16.msra.mxu0 0
  %862 = vmatprep.subr.bf16.mxu0 0
  %863 = vmatpush1.bf16.msra.mxu0 0
  %864 = vmatprep.subr.bf16.mxu0 0
  %865 = vmatpush1.bf16.msra.mxu0 0
  %866 = vmatprep.subr.bf16.mxu0 0
  %867 = vmatpush1.bf16.msra.mxu0 0
  %868 = vmatprep.subr.bf16.mxu0 0
  %869 = vmatpush1.bf16.msra.mxu0 0
  %870 = vmatprep.subr.bf16.mxu0 0
  %871 = vmatpush1.bf16.msra.mxu0 0
  %872 = vmatprep.subr.bf16.mxu0 0
  %873 = vmatpush1.bf16.msra.mxu0 0
  %874 = vmatprep.subr.bf16.mxu0 0
  %875 = vmatpush1.bf16.msra.mxu0 0
  %876 = vmatprep.subr.bf16.mxu0 0
  %877 = vmatpush1.bf16.msra.mxu0 0
  %878 = vmatprep.mubr.bf16.mxu0 0
  %879 = vmatmul.mubr.bf16.gmra.mrb[0].mxu0 %v844
  %v880 = vpop.f32.mrb[0].mxu0
  %v881 = vadd.f32 0.0, %v880
  %v882 = vpop.f32.mrb[0].mxu0
  %v883 = vpop.f32.mrb[0].mxu0
  %v884 = vpop.f32.mrb[0].mxu0
  %885 = vdwg.mxu0
  %v886 = vsel %vm35, %v881, -inf
  %887 = vmax.xlane.f32.xlu0 %v886
  %v888 = vpop.xlane.xlu0 %887
  %v889 = vsub.f32 %v881, %v888
  %v890 = vmul.f32 %v889, 1.442695
  %v891 = vpow.pop %v890
  %v892 = vsel %vm35, %v891, 0.0
  %893 = vadd.xlane.f32.xlu0 %v892
  %v894 = vpop.xlane.xlu0 %893
  %v895 = vrcp.pop %v894
  %v896 = vmul.f32 %v891, %v895
  %v897 = vpack.c.bf16 %v896, %v896
  %v899 = vsel %vm35, %v825, 0
  %v902 = vsel %vm35, %v826, 0
  %v905 = vsel %vm35, %v897, 0
  %907 = vmatprep.subr.bf16.mxu0 0
  %908 = vmatpush1.bf16.xpose.msra.mxu0 %v905
  %909 = vmatprep.subr.bf16.mxu0 0
  %910 = vmatpush1.bf16.xpose.msra.mxu0 0
  %911 = vmatprep.subr.bf16.mxu0 0
  %912 = vmatpush1.bf16.xpose.msra.mxu0 0
  %913 = vmatprep.subr.bf16.mxu0 0
  %914 = vmatpush1.bf16.xpose.msra.mxu0 0
  %915 = vmatprep.subr.bf16.mxu0 0
  %916 = vmatpush1.bf16.xpose.msra.mxu0 0
  %917 = vmatprep.subr.bf16.mxu0 0
  %918 = vmatpush1.bf16.xpose.msra.mxu0 0
  %919 = vmatprep.subr.bf16.mxu0 0
  %920 = vmatpush1.bf16.xpose.msra.mxu0 0
  %921 = vmatprep.subr.bf16.mxu0 0
  %922 = vmatpush1.bf16.xpose.msra.mxu0 0
  %923 = vmatprep.subr.bf16.mxu0 0
  %924 = vmatpush1.bf16.xpose.msra.mxu0 0
  %925 = vmatprep.subr.bf16.mxu0 0
  %926 = vmatpush1.bf16.xpose.msra.mxu0 0
  %927 = vmatprep.subr.bf16.mxu0 0
  %928 = vmatpush1.bf16.xpose.msra.mxu0 0
  %929 = vmatprep.subr.bf16.mxu0 0
  %930 = vmatpush1.bf16.xpose.msra.mxu0 0
  %931 = vmatprep.subr.bf16.mxu0 0
  %932 = vmatpush1.bf16.xpose.msra.mxu0 0
  %933 = vmatprep.subr.bf16.mxu0 0
  %934 = vmatpush1.bf16.xpose.msra.mxu0 0
  %935 = vmatprep.subr.bf16.mxu0 0
  %936 = vmatpush1.bf16.xpose.msra.mxu0 0
  %937 = vmatprep.subr.bf16.mxu0 0
  %938 = vmatpush1.bf16.xpose.msra.mxu0 0
  %939 = vmatprep.mubr.bf16.mxu0 0
  %940 = vmatmul.mubr.bf16.gmra.mrb[0].mxu0 %v899
  %v941 = vpop.f32.mrb[0].mxu0
  %v942 = vadd.f32 0.0, %v941
  %v943 = vpop.f32.mrb[0].mxu0
  %v944 = vpop.f32.mrb[0].mxu0
  %v945 = vadd.f32 0.0, %v944
  %v946 = vpop.f32.mrb[0].mxu0
  %947 = vmatprep.mubr.bf16.mxu0 0
  %948 = vmatmul.mubr.bf16.gmra.mrb[0].mxu0 %v902
  %v949 = vpop.f32.mrb[0].mxu0
  %v950 = vadd.f32 0.0, %v949
  %v951 = vpop.f32.mrb[0].mxu0
  %v952 = vpop.f32.mrb[0].mxu0
  %v953 = vadd.f32 0.0, %v952
  %v954 = vpop.f32.mrb[0].mxu0
  %955 = vdwg.mxu0
  %v956 = vpack.c.bf16 %v945, %v942
  %v957 = vpack.c.bf16 %v953, %v950
  %958 = vmatprep.subr.bf16.mxu0 0
  %959 = vmatpush1.bf16.msra.mxu0 %v956
  %960 = vmatprep.subr.bf16.mxu0 0
  %961 = vmatpush1.bf16.msra.mxu0 %v957
  %962 = vmatprep.subr.bf16.mxu0 0
  %963 = vmatpush1.bf16.msra.mxu0 0
  %964 = vmatprep.subr.bf16.mxu0 0
  %965 = vmatpush1.bf16.msra.mxu0 0
  %966 = vmatprep.subr.bf16.mxu0 0
  %967 = vmatpush1.bf16.msra.mxu0 0
  %968 = vmatprep.subr.bf16.mxu0 0
  %969 = vmatpush1.bf16.msra.mxu0 0
  %970 = vmatprep.subr.bf16.mxu0 0
  %971 = vmatpush1.bf16.msra.mxu0 0
  %972 = vmatprep.subr.bf16.mxu0 0
  %973 = vmatpush1.bf16.msra.mxu0 0
  %974 = vmatprep.subr.bf16.mxu0 0
  %975 = vmatpush1.bf16.msra.mxu0 0
  %976 = vmatprep.subr.bf16.mxu0 0
  %977 = vmatpush1.bf16.msra.mxu0 0
  %978 = vmatprep.subr.bf16.mxu0 0
  %979 = vmatpush1.bf16.msra.mxu0 0
  %980 = vmatprep.subr.bf16.mxu0 0
  %981 = vmatpush1.bf16.msra.mxu0 0
  %982 = vmatprep.subr.bf16.mxu0 0
  %983 = vmatpush1.bf16.msra.mxu0 0
  %984 = vmatprep.subr.bf16.mxu0 0
  %985 = vmatpush1.bf16.msra.mxu0 0
  %986 = vmatprep.subr.bf16.mxu0 0
  %987 = vmatpush1.bf16.msra.mxu0 0
  %988 = vmatprep.subr.bf16.mxu0 0
  %989 = vmatpush1.bf16.msra.mxu0 0
  %990 = vmatprep.mubr.bf16.mxu0 0
  %991 = vmatmul.mubr.bf16.gmra.mrb[0].mxu0 %v674
  %v992 = vpop.f32.mrb[0].mxu0
  %v993 = vadd.f32 %v646, %v992
  %v994 = vpop.f32.mrb[0].mxu0
  %v995 = vpop.f32.mrb[0].mxu0
  %v996 = vadd.f32 %v651, %v995
  %v997 = vpop.f32.mrb[0].mxu0
  %998 = vmatprep.mubr.bf16.mxu0 0
  %999 = vmatmul.mubr.bf16.gmra.mrb[0].mxu0 %v677
  %v1000 = vpop.f32.mrb[0].mxu0
  %v1001 = vadd.f32 %v656, %v1000
  %v1002 = vpop.f32.mrb[0].mxu0
  %v1003 = vpop.f32.mrb[0].mxu0
  %v1004 = vadd.f32 %v661, %v1003
  %v1005 = vpop.f32.mrb[0].mxu0
  %1006 = vdwg.mxu0
  %v1007 = vadd.f32 %v31, %v993
  %v1008 = vadd.f32 %v32, %v996
  %v1009 = vadd.f32 %v33, %v1001
  %v1010 = vadd.f32 %v34, %v1004
  %s1011 = scalar_lea.vmem %s7, 32
  %1012 = vst.msk [vmem:[%s1011] sm:$0xff] %vm35, %v1007
  %1013 = vst.msk [vmem:[%s1011 + $0x8] sm:$0xff] %vm35, %v1008
  %1014 = vst.msk [vmem:[%s1011 + $0x10] sm:$0xff] %vm35, %v1009
  %1015 = vst.msk [vmem:[%s1011 + $0x18] sm:$0xff] %vm35, %v1010
  // Predicated region
  $region30: #{tpu_custom_call.1} parent=0 // pred_check
    _
  $region31: #{tpu_custom_call.1} parent=0 // pred_check_branch
    %1017 = sbr.rel (0) target = $region33
  $region32: #{tpu_custom_call.1} parent=0 // pred_region
    _
  $region33: #{tpu_custom_call.1} parent=0 // pred_fallthru
    _
  // Predicated region
  $region34: #{tpu_custom_call.1} parent=0 // pred_check
    _
  $region35: #{tpu_custom_call.1} parent=0 // pred_check_branch
    %1019 = sbr.rel (0) target = $region37
  $region36: #{tpu_custom_call.1} parent=0 // pred_region
    _
  $region37: #{tpu_custom_call.1} parent=0 // pred_fallthru
    _

</llo_original>
